<compile_context>
chip_gen: v5e
topology: v5e:2x2
jax: 0.10.0
libtpu: 0.0.40
codegen_flags: <defaults>
</compile_context>

<pallas_src>
import jax
import jax.numpy as jnp
from jax.experimental import pallas as pl
from jax.experimental.pallas import tpu as pltpu

_LANE = 128
_VMEM_LIMIT_BYTES = 48 * 1024 * 1024          # headroom on every generation (v7x: 64 MiB phys)
_FUSED_SLAB_BUDGET = 8 * 1024 * 1024          # in+out bytes per grid step (before double-buffer)


def _round_up(a, b):
    return (a + b - 1) // b * b


# --------------------------------------------------------------------------------------
# Parameter packing (do once at parameter-init time, NOT per forward call)
# --------------------------------------------------------------------------------------
def pack_scse_params(w1, b1, w2, b2, wss, bss):
    """Packs the SCSE weights into one lane-dense f32 buffer of shape (C+1, 2*Cr+2).

      rows 0..C-1 : [ w1^T (C,Cr) | w2 (C,Cr) | b2 (C,1) | wss (C,1) ]
      row  C      : [ b1 (Cr)     | bss       | 0 ...               ]

    Args:
      w1:  (Cr, C)  cSE first 1x1-conv weight  (Conv2d(C, C//r, 1)).
      b1:  (Cr,)    its bias.
      w2:  (C, Cr)  cSE second 1x1-conv weight (Conv2d(C//r, C, 1)).
      b2:  (C,)     its bias.
      wss: (C,)     sSE 1x1-conv weight        (Conv2d(C, 1, 1)).
      bss: ()       its bias.
    """
    f32 = jnp.float32
    w1 = jnp.asarray(w1, f32)
    Cr, C = w1.shape
    w2 = jnp.asarray(w2, f32).reshape(C, Cr)
    b1 = jnp.asarray(b1, f32).reshape(Cr)
    b2 = jnp.asarray(b2, f32).reshape(C)
    wss = jnp.asarray(wss, f32).reshape(C)
    bss = jnp.asarray(bss, f32).reshape(())

    P = jnp.zeros((C + 1, 2 * Cr + 2), f32)
    P = P.at[0:C, 0:Cr].set(w1.T)
    P = P.at[0:C, Cr:2 * Cr].set(w2)
    P = P.at[0:C, 2 * Cr].set(b2)
    P = P.at[0:C, 2 * Cr + 1].set(wss)
    P = P.at[C, 0:Cr].set(b1)
    P = P.at[C, Cr].set(bss)
    return P


# --------------------------------------------------------------------------------------
# Fused single-pass kernel (whole (Bt, C, HW) slab resident per grid step)
# --------------------------------------------------------------------------------------
def _make_fused_kernel(C, Cr, HW):
    inv_hw = 1.0 / float(HW)

    def kernel(x_ref, p_ref, o_ref):
        x = x_ref[...]                                   # (Bt, C, HWp), native dtype
        P = p_ref[...]                                   # (C+1, 2Cr+2), f32
        w1t = P[0:C, 0:Cr]                               # (C, Cr)
        w2 = P[0:C, Cr:2 * Cr]                           # (C, Cr)
        b2 = P[0:C, 2 * Cr:2 * Cr + 1]                   # (C, 1)
        wss = P[0:C, 2 * Cr + 1:2 * Cr + 2]              # (C, 1)
        b1 = P[C:C + 1, 0:Cr]                            # (1, Cr)
        bss = P[C:C + 1, Cr:Cr + 1]                      # (1, 1)

        # ---- cSE gate: pool / FC logits / sigmoid in f32 ----
        pool = jnp.sum(x.astype(jnp.float32), axis=2, keepdims=True) * inv_hw   # (Bt, C, 1)
        h = jnp.sum(w1t[None] * pool, axis=1, keepdims=True) + b1[None]         # (Bt, 1, Cr)
        h = jnp.maximum(h, 0.0)                                                  # ReLU
        c_logit = jnp.sum(w2[None] * h, axis=2, keepdims=True) + b2[None]        # (Bt, C, 1)
        s_c = jax.nn.sigmoid(c_logit)                                            # (Bt, C, 1)

        # ---- sSE gate: multiply in native dtype, accumulate logit in f32 ----
        # (for C >= 256 this channel reduction could use the idle MXU instead)
        wss_x = wss.astype(x.dtype)
        s_logit = jnp.sum((x * wss_x[None]).astype(jnp.float32),
                          axis=1, keepdims=True) + bss[None]                     # (Bt, 1, HWp)
        s_s = jax.nn.sigmoid(s_logit)                                            # (Bt, 1, HWp)

        # ---- combine exactly like the module: x*cSE(x) + x*sSE(x) (native dtype) ----
        o_ref[...] = (x * s_c.astype(x.dtype) + x * s_s.astype(x.dtype)).astype(o_ref.dtype)

    return kernel


# --------------------------------------------------------------------------------------
# Forward
# --------------------------------------------------------------------------------------
def scse_attention_pallas(x, packed_params, *, slab_budget_bytes=_FUSED_SLAB_BUDGET):
    """SCSE attention forward: x * cSE(x) + x * sSE(x).

    x:             (B, C, H, W) NCHW input (f32 or bf16).
    packed_params: (C+1, 2*Cr+2) f32 buffer from pack_scse_params (pre-packed at init).
    """
    B, C, H, W = x.shape
    pr, pc = packed_params.shape
    assert pr == C + 1, "packed params do not match channel count"
    Cr = (pc - 2) // 2
    HW = H * W
    dsize = x.dtype.itemsize

    # Lane-density guard: pad spatial axis to a multiple of 128 only when needed.
    HWp = HW if HW % _LANE == 0 else _round_up(HW, _LANE)
    x3 = x.reshape(B, C, HW)                       # metadata-only reshape
    if HWp != HW:
        x3 = jnp.pad(x3, ((0, 0), (0, 0), (0, HWp - HW)))

    bytes_per_batch = 2 * C * HWp * dsize          # one input + one output slab

    if bytes_per_batch <= slab_budget_bytes:
        # ------------------------ fused single-pass path ------------------------
        # Process as many batch elements per grid step as the VMEM budget allows
        # (collapses to grid=(1,) for small feature maps -> minimal per-step overhead).
        max_bt = max(1, slab_budget_bytes // bytes_per_batch)
        bt = max(d for d in range(1, B + 1) if B % d == 0 and d <= max_bt)
        grid = (B // bt,)

        out3 = pl.pallas_call(
            _make_fused_kernel(C, Cr, HW),
            out_shape=jax.ShapeDtypeStruct((B, C, HWp), x.dtype),
            grid=grid,
            in_specs=[
                pl.BlockSpec((bt, C, HWp), lambda b: (b, 0, 0)),
                pl.BlockSpec((C + 1, 2 * Cr + 2), lambda b: (0, 0)),
            ],
            out_specs=pl.BlockSpec((bt, C, HWp), lambda b: (b, 0, 0)),
            compiler_params=pltpu.CompilerParams(
                dimension_semantics=("parallel",),
                vmem_limit_bytes=_VMEM_LIMIT_BYTES),
        )(x3, packed_params)

        return out3[:, :, :HW].reshape(B, C, H, W)

    # ------------------ two-pass, HW-tiled path (large feature maps) ------------------
    # Pass 1 sweeps HW tiles accumulating the global pool; the tiny FCs run in plain
    # JAX (B*C elements); pass 2 applies both gates fully tiled and fully parallel.
    thw_lanes = max(1, slab_budget_bytes // (2 * C * _LANE * dsize))
    THW = min(_LANE * thw_lanes, _round_up(HW, _LANE))
    HWt = _round_up(HW, THW)
    if HWt != HWp:                                  # re-pad to a multiple of the tile
        x3 = x.reshape(B, C, HW)
        x3 = jnp.pad(x3, ((0, 0), (0, 0), (0, HWt - HW)))
        HWp = HWt
    nhw = HWp // THW

    def pool_kernel(x_ref, s_ref, acc_ref):
        @pl.when(pl.program_id(1) == 0)
        def _():
            acc_ref[...] = jnp.zeros_like(acc_ref)
        acc_ref[...] += jnp.sum(x_ref[0].astype(jnp.float32), axis=1, keepdims=True)
        @pl.when(pl.program_id(1) == pl.num_programs(1) - 1)
        def _():
            s_ref[0] = acc_ref[...]

    pool = pl.pallas_call(
        pool_kernel,
        out_shape=jax.ShapeDtypeStruct((B, C, 1), jnp.float32),
        grid=(B, nhw),
        in_specs=[pl.BlockSpec((1, C, THW), lambda b, t: (b, 0, t))],
        out_specs=pl.BlockSpec((1, C, 1), lambda b, t: (b, 0, 0)),
        scratch_shapes=[pltpu.VMEM((C, 1), jnp.float32)],
        compiler_params=pltpu.CompilerParams(
            dimension_semantics=("parallel", "arbitrary"),
            vmem_limit_bytes=_VMEM_LIMIT_BYTES),
    )(x3)

    # Tiny cSE FCs (B x C values) — negligible, plain JAX.
    avg = pool[:, :, 0] * (1.0 / float(HW))                       # (B, C)
    w1t = packed_params[0:C, 0:Cr]                                # (C, Cr)
    w2 = packed_params[0:C, Cr:2 * Cr]                            # (C, Cr)
    b2 = packed_params[0:C, 2 * Cr]                               # (C,)
    b1 = packed_params[C, 0:Cr]                                   # (Cr,)
    h = jnp.maximum(avg @ w1t + b1, 0.0)                          # (B, Cr)
    s_c = jax.nn.sigmoid(h @ w2.T + b2)[:, :, None]               # (B, C, 1) f32

    def apply_kernel(x_ref, sc_ref, p_ref, o_ref):
        x_t = x_ref[...]                                          # (1, C, THW)
        P = p_ref[...]
        wss = P[0:C, 2 * Cr + 1:2 * Cr + 2]                       # (C, 1)
        bss = P[C:C + 1, Cr:Cr + 1]                               # (1, 1)
        s_logit = jnp.sum((x_t * wss[None].astype(x_t.dtype)).astype(jnp.float32),
                          axis=1, keepdims=True) + bss[None]      # (1, 1, THW)
        s_s = jax.nn.sigmoid(s_logit)
        s_cb = sc_ref[...]                                        # (1, C, 1)
        o_ref[...] = (x_t * s_cb.astype(x_t.dtype)
                      + x_t * s_s.astype(x_t.dtype)).astype(o_ref.dtype)

    out3 = pl.pallas_call(
        apply_kernel,
        out_shape=jax.ShapeDtypeStruct((B, C, HWp), x.dtype),
        grid=(B, nhw),
        in_specs=[
            pl.BlockSpec((1, C, THW), lambda b, t: (b, 0, t)),
            pl.BlockSpec((1, C, 1), lambda b, t: (b, 0, 0)),
            pl.BlockSpec((C + 1, 2 * Cr + 2), lambda b, t: (0, 0)),
        ],
        out_specs=pl.BlockSpec((1, C, THW), lambda b, t: (b, 0, t)),
        compiler_params=pltpu.CompilerParams(
            dimension_semantics=("parallel", "parallel"),
            vmem_limit_bytes=_VMEM_LIMIT_BYTES),
    )(x3, s_c, packed_params)

    return out3[:, :, :HW].reshape(B, C, H, W)


def attention_forward(x, name=None, packed_params=None, **raw_params):
    """Mirrors Attention.forward: Identity when name is None, SCSE when 'scse'.

    Prefer passing `packed_params` built once with pack_scse_params (init-time),
    otherwise raw weights (w1, b1, w2, b2, wss, bss) are packed on the fly.
    """
    if name is None:
        return x
    if name == "scse":
        if packed_params is None:
            packed_params = pack_scse_params(**raw_params)
        return scse_attention_pallas(x, packed_params)
    raise ValueError("Attention {} is not implemented".format(name))


# --------------------------------------------------------------------------------------
# Self-test
# --------------------------------------------------------------------------------------
if __name__ == "__main__":
    key = jax.random.PRNGKey(0)
    B, C, H, W = 2, 64, 16, 16          # in_channels = 64 (from the spec)
    reduction = 16
    Cr = C // reduction

    ks = jax.random.split(key, 7)
    x = jax.random.normal(ks[0], (B, C, H, W), dtype=jnp.float32)
    w1 = jax.random.normal(ks[1], (Cr, C), dtype=jnp.float32) * 0.1
    b1 = jax.random.normal(ks[2], (Cr,), dtype=jnp.float32) * 0.1
    w2 = jax.random.normal(ks[3], (C, Cr), dtype=jnp.float32) * 0.1
    b2 = jax.random.normal(ks[4], (C,), dtype=jnp.float32) * 0.1
    wss = jax.random.normal(ks[5], (C,), dtype=jnp.float32) * 0.1
    bss = jax.random.normal(ks[6], (), dtype=jnp.float32) * 0.1

    # Pack the weights ONCE (init-time), not inside the forward path.
    packed = pack_scse_params(w1, b1, w2, b2, wss, bss)
    packed = jax.block_until_ready(packed)

    def scse_ref(xr):
        avg = jnp.mean(xr, axis=(2, 3))                                   # (B, C)
        hh = jnp.maximum(avg @ w1.T + b1, 0.0)                            # (B, Cr)
        cse = jax.nn.sigmoid(hh @ w2.T + b2)                              # (B, C)
        sse = jax.nn.sigmoid(jnp.einsum("bchw,c->bhw", xr, wss) + bss)    # (B, H, W)
        return xr * cse[:, :, None, None] + xr * sse[:, None, :, :]

    # --- fused single-pass path (grid collapses to a single step at this size) ---
    y = attention_forward(x, name="scse", packed_params=packed)
    y = jax.block_until_ready(y)
    y_ref = scse_ref(x)
    assert y.shape == x.shape and y.dtype == x.dtype
    err = float(jnp.max(jnp.abs(y - y_ref)))
    assert jnp.allclose(y, y_ref, atol=1e-5, rtol=1e-5), err

    # --- two-pass HW-tiled path (force it with a tiny VMEM budget) ---
    y_tiled = scse_attention_pallas(x, packed, slab_budget_bytes=32 * 1024)
    y_tiled = jax.block_until_ready(y_tiled)
    err_t = float(jnp.max(jnp.abs(y_tiled - y_ref)))
    assert jnp.allclose(y_tiled, y_ref, atol=1e-5, rtol=1e-5), err_t

    # --- lane-padding path (HW not a multiple of 128) ---
    x_odd = jax.random.normal(ks[0], (B, C, 10, 10), dtype=jnp.float32)
    y_odd = scse_attention_pallas(x_odd, packed)
    y_odd = jax.block_until_ready(y_odd)
    y_odd_ref = scse_ref(x_odd)
    err_o = float(jnp.max(jnp.abs(y_odd - y_odd_ref)))
    assert jnp.allclose(y_odd, y_odd_ref, atol=1e-5, rtol=1e-5), err_o

    # --- Identity path (name=None) ---
    y_id = attention_forward(x, name=None)
    assert jnp.allclose(y_id, x)

    print("KERNEL_OK")
</pallas_src>

<mosaic_0001>
module attributes {stable_mosaic.version = 11 : i64} {
  func.func @kernel(%arg0: i32, %arg1: memref<2x64x256xf32, #tpu.memory_space<vmem>>, %arg2: memref<65x10xf32, #tpu.memory_space<vmem>>, %arg3: memref<2x64x256xf32, #tpu.memory_space<vmem>>) attributes {dimension_semantics = [#tpu.dimension_semantics<parallel>], iteration_bounds = array<i64: 1>, scalar_prefetch = 0 : i64, scratch_operands = 0 : i64, tpu.core_type = #tpu.core_type<tc>, window_params = [{transform_indices = @transform_0, window_bounds = array<i64: 2, 64, 256>}, {pipeline_mode = #tpu.pipeline_mode<synchronous>, transform_indices = @transform_1, window_bounds = array<i64: 65, 10>}, {transform_indices = @transform_2, window_bounds = array<i64: 2, 64, 256>}]} {
    %c0 = arith.constant 0 : index
    %c0_0 = arith.constant 0 : index
    %c0_1 = arith.constant 0 : index
    %0 = vector.load %arg1[%c0, %c0_0, %c0_1] : memref<2x64x256xf32, #tpu.memory_space<vmem>>, vector<2x64x256xf32>
    %c0_2 = arith.constant 0 : index
    %c0_3 = arith.constant 0 : index
    %1 = vector.load %arg2[%c0_2, %c0_3] : memref<65x10xf32, #tpu.memory_space<vmem>>, vector<65x10xf32>
    %2 = vector.extract_strided_slice %1 {offsets = [0, 0], sizes = [64, 4], strides = [1, 1]} : vector<65x10xf32> to vector<64x4xf32>
    %3 = vector.extract_strided_slice %1 {offsets = [0, 4], sizes = [64, 4], strides = [1, 1]} : vector<65x10xf32> to vector<64x4xf32>
    %4 = vector.extract_strided_slice %1 {offsets = [0, 8], sizes = [64, 1], strides = [1, 1]} : vector<65x10xf32> to vector<64x1xf32>
    %5 = vector.extract_strided_slice %1 {offsets = [0, 9], sizes = [64, 1], strides = [1, 1]} : vector<65x10xf32> to vector<64x1xf32>
    %6 = vector.extract_strided_slice %1 {offsets = [64, 0], sizes = [1, 4], strides = [1, 1]} : vector<65x10xf32> to vector<1x4xf32>
    %7 = vector.extract_strided_slice %1 {offsets = [64, 4], sizes = [1, 1], strides = [1, 1]} : vector<65x10xf32> to vector<1x1xf32>
    %cst = arith.constant dense<0.000000e+00> : vector<2x64xf32>
    %8 = vector.multi_reduction <add>, %0, %cst [2] : vector<2x64x256xf32> to vector<2x64xf32>
    %9 = vector.shape_cast %8 : vector<2x64xf32> to vector<2x64x1xf32>
    %cst_4 = arith.constant 3.906250e-03 : f32
    %10 = vector.broadcast %cst_4 : f32 to vector<2x64x1xf32>
    %11 = arith.mulf %9, %10 : vector<2x64x1xf32>
    %12 = vector.shape_cast %2 : vector<64x4xf32> to vector<1x64x4xf32>
    %13 = vector.broadcast %12 : vector<1x64x4xf32> to vector<2x64x4xf32>
    %14 = vector.broadcast %11 : vector<2x64x1xf32> to vector<2x64x4xf32>
    %15 = arith.mulf %13, %14 : vector<2x64x4xf32>
    %cst_5 = arith.constant dense<0.000000e+00> : vector<2x4xf32>
    %16 = vector.multi_reduction <add>, %15, %cst_5 [1] : vector<2x64x4xf32> to vector<2x4xf32>
    %17 = vector.shape_cast %16 : vector<2x4xf32> to vector<2x1x4xf32>
    %18 = vector.shape_cast %6 : vector<1x4xf32> to vector<1x1x4xf32>
    %19 = vector.broadcast %18 : vector<1x1x4xf32> to vector<2x1x4xf32>
    %20 = arith.addf %17, %19 : vector<2x1x4xf32>
    %cst_6 = arith.constant 0.000000e+00 : f32
    %21 = vector.broadcast %cst_6 : f32 to vector<2x1x4xf32>
    %22 = arith.maximumf %20, %21 : vector<2x1x4xf32>
    %23 = vector.shape_cast %3 : vector<64x4xf32> to vector<1x64x4xf32>
    %24 = vector.broadcast %23 : vector<1x64x4xf32> to vector<2x64x4xf32>
    %25 = vector.broadcast %22 : vector<2x1x4xf32> to vector<2x64x4xf32>
    %26 = arith.mulf %24, %25 : vector<2x64x4xf32>
    %cst_7 = arith.constant dense<0.000000e+00> : vector<2x64xf32>
    %27 = vector.multi_reduction <add>, %26, %cst_7 [2] : vector<2x64x4xf32> to vector<2x64xf32>
    %28 = vector.shape_cast %27 : vector<2x64xf32> to vector<2x64x1xf32>
    %29 = vector.shape_cast %4 : vector<64x1xf32> to vector<1x64x1xf32>
    %30 = vector.broadcast %29 : vector<1x64x1xf32> to vector<2x64x1xf32>
    %31 = arith.addf %28, %30 : vector<2x64x1xf32>
    %32 = arith.negf %31 : vector<2x64x1xf32>
    %33 = math.exp %32 : vector<2x64x1xf32>
    %cst_8 = arith.constant 1.000000e+00 : f32
    %34 = vector.broadcast %cst_8 : f32 to vector<2x64x1xf32>
    %35 = arith.addf %34, %33 : vector<2x64x1xf32>
    %36 = arith.divf %34, %35 : vector<2x64x1xf32>
    %37 = vector.shape_cast %5 : vector<64x1xf32> to vector<1x64x1xf32>
    %38 = vector.broadcast %37 : vector<1x64x1xf32> to vector<2x64x256xf32>
    %39 = arith.mulf %0, %38 : vector<2x64x256xf32>
    %cst_9 = arith.constant dense<0.000000e+00> : vector<2x256xf32>
    %40 = vector.multi_reduction <add>, %39, %cst_9 [1] : vector<2x64x256xf32> to vector<2x256xf32>
    %41 = vector.shape_cast %40 : vector<2x256xf32> to vector<2x1x256xf32>
    %42 = vector.shape_cast %7 : vector<1x1xf32> to vector<1x1x1xf32>
    %43 = vector.broadcast %42 : vector<1x1x1xf32> to vector<2x1x256xf32>
    %44 = arith.addf %41, %43 : vector<2x1x256xf32>
    %45 = arith.negf %44 : vector<2x1x256xf32>
    %46 = math.exp %45 : vector<2x1x256xf32>
    %cst_10 = arith.constant 1.000000e+00 : f32
    %47 = vector.broadcast %cst_10 : f32 to vector<2x1x256xf32>
    %48 = arith.addf %47, %46 : vector<2x1x256xf32>
    %49 = arith.divf %47, %48 : vector<2x1x256xf32>
    %50 = vector.broadcast %36 : vector<2x64x1xf32> to vector<2x64x256xf32>
    %51 = arith.mulf %0, %50 : vector<2x64x256xf32>
    %52 = vector.broadcast %49 : vector<2x1x256xf32> to vector<2x64x256xf32>
    %53 = arith.mulf %0, %52 : vector<2x64x256xf32>
    %54 = arith.addf %51, %53 : vector<2x64x256xf32>
    %c0_11 = arith.constant 0 : index
    %c0_12 = arith.constant 0 : index
    %c0_13 = arith.constant 0 : index
    %55 = vector.load %arg3[%c0_11, %c0_12, %c0_13] : memref<2x64x256xf32, #tpu.memory_space<vmem>>, vector<2x64x256xf32>
    tpu.vector_store %arg3[%c0_11, %c0_12, %c0_13], %54 {strides = array<i32>} : memref<2x64x256xf32, #tpu.memory_space<vmem>>, vector<2x64x256xf32>,
    return
  }
  func.func @transform_0(%arg0: i32) -> (i32, i32, i32) {
    %c0_i32 = arith.constant 0 : i32
    %c0_i32_0 = arith.constant 0 : i32
    %c0_i32_1 = arith.constant 0 : i32
    return %arg0, %c0_i32, %c0_i32_0 : i32, i32, i32
  }
  func.func @transform_1(%arg0: i32) -> (i32, i32) {
    %c0_i32 = arith.constant 0 : i32
    %c0_i32_0 = arith.constant 0 : i32
    %c0_i32_1 = arith.constant 0 : i32
    return %c0_i32, %c0_i32_0 : i32, i32
  }
  func.func @transform_2(%arg0: i32) -> (i32, i32, i32) {
    %c0_i32 = arith.constant 0 : i32
    %c0_i32_0 = arith.constant 0 : i32
    %c0_i32_1 = arith.constant 0 : i32
    return %arg0, %c0_i32, %c0_i32_0 : i32, i32, i32
  }
}

</mosaic_0001>

<llo_original>
// kernel: tpu_custom_call.1
$region0: #{tpu_custom_call.1}
  #allocation0 [shape = 'u32[]', space=smem, size = 0x4, offset = 0x4, fixed_abs, tag = 'smem constant byte address 0x4 - core index']
  #allocation1 [shape = 'u32[72,128]{1,0:T(1,128)}', space=vmem, size = 0x9000, scoped, tag = 'internal scratch']
  %s0 = inlined_call_operand.hbm [shape: f32[2,64,256], index: 0, kind: input, shape index: {}]
  %s1 = inlined_call_operand.vmem [shape: f32[65,10], index: 1, kind: input, shape index: {}]
  %s2 = inlined_call_operand.hbm [shape: f32[2,64,256], index: 2, kind: output, shape index: {}]
  %s3 = sld [smem:[#allocation0]]
  $region22: #{tpu_custom_call.1} parent=0
    _
  %s5 = ssub.s32 1, %s3
  %s6 = scalar_select 0, %s5, %s3
  $region1: #{tpu_custom_call.1} parent=0
    #allocation2 [shape = 'u8[131072]{0}', space=vmem, size = 0x20000, scoped, tag = 'input window, operand 0, single buffered']
    #allocation3 [shape = 's32[1]{0}', space=sflag, size = 0x4, scoped, tag = 'scoped memory for tpu_custom_call.1']
    #allocation4 [shape = 's32[1]{0}', space=sflag, size = 0x4, scoped, tag = 'scoped memory for tpu_custom_call.1']
    #allocation5 [shape = 'u8[131072]{0}', space=vmem, size = 0x20000, scoped, tag = 'output window, operand 0, single buffered']
    %7 = vsyncpa [#allocation3], 0
    %8 = vsyncpa [#allocation4], 0
    // Predicated region
    $region2: #{tpu_custom_call.1} parent=1 // pred_check
      _
    $region3: #{tpu_custom_call.1} parent=1 // pred_check_branch
      %10 = sbr.rel (0) target = $region5
    $region4: #{tpu_custom_call.1} parent=1 // pred_region
      %12 = vsyncadd [#allocation3], 0
      %s13 = sshll.u32 %s0, 4
      %s14 = int_to_ptr.hbm [resolvable:$true] %s13
      %s15 = sshll.u32 [#allocation2], 4
      %s16 = int_to_ptr.vmem [resolvable:$true] %s15
      %21 = dma.hbm_to_vmem [thread:$0]  %s14, 4096, %s16, [#allocation3], 256, 256, 16
    $region5: #{tpu_custom_call.1} parent=1 // pred_fallthru
      _
    // Predicated region
    $region6: #{tpu_custom_call.1} parent=1 // pred_check
      _
    $region7: #{tpu_custom_call.1} parent=1 // pred_check_branch
      %23 = sbr.rel (0) target = $region9
    $region8: #{tpu_custom_call.1} parent=1 // pred_region
      _
    $region9: #{tpu_custom_call.1} parent=1 // pred_fallthru
      _
    // Predicated region
    $region10: #{tpu_custom_call.1} parent=1 // pred_check
      _
    $region11: #{tpu_custom_call.1} parent=1 // pred_check_branch
      %25 = sbr.rel (0) target = $region13
    $region12: #{tpu_custom_call.1} parent=1 // pred_region
      %27 = dma.done [#allocation3], 4096
    $region13: #{tpu_custom_call.1} parent=1 // pred_fallthru
      _
    %v28 = vld [vmem:[#allocation2] sm:$0xff]
    %v29 = vld [vmem:[#allocation2 + $0x8] sm:$0xff]
    %v30 = vld [vmem:[#allocation2 + $0x10] sm:$0xff]
    %v31 = vld [vmem:[#allocation2 + $0x18] sm:$0xff]
    %v32 = vld [vmem:[#allocation2 + $0x20] sm:$0xff]
    %v33 = vld [vmem:[#allocation2 + $0x28] sm:$0xff]
    %v34 = vld [vmem:[#allocation2 + $0x30] sm:$0xff]
    %v35 = vld [vmem:[#allocation2 + $0x38] sm:$0xff]
    %v36 = vld [vmem:[#allocation2 + $0x40] sm:$0xff]
    %v37 = vld [vmem:[#allocation2 + $0x48] sm:$0xff]
    %v38 = vld [vmem:[#allocation2 + $0x50] sm:$0xff]
    %v39 = vld [vmem:[#allocation2 + $0x58] sm:$0xff]
    %v40 = vld [vmem:[#allocation2 + $0x60] sm:$0xff]
    %v41 = vld [vmem:[#allocation2 + $0x68] sm:$0xff]
    %v42 = vld [vmem:[#allocation2 + $0x70] sm:$0xff]
    %v43 = vld [vmem:[#allocation2 + $0x78] sm:$0xff]
    %v44 = vld [vmem:[#allocation2 + $0x80] sm:$0xff]
    %v45 = vld [vmem:[#allocation2 + $0x88] sm:$0xff]
    %v46 = vld [vmem:[#allocation2 + $0x90] sm:$0xff]
    %v47 = vld [vmem:[#allocation2 + $0x98] sm:$0xff]
    %v48 = vld [vmem:[#allocation2 + $0xa0] sm:$0xff]
    %v49 = vld [vmem:[#allocation2 + $0xa8] sm:$0xff]
    %v50 = vld [vmem:[#allocation2 + $0xb0] sm:$0xff]
    %v51 = vld [vmem:[#allocation2 + $0xb8] sm:$0xff]
    %v52 = vld [vmem:[#allocation2 + $0xc0] sm:$0xff]
    %v53 = vld [vmem:[#allocation2 + $0xc8] sm:$0xff]
    %v54 = vld [vmem:[#allocation2 + $0xd0] sm:$0xff]
    %v55 = vld [vmem:[#allocation2 + $0xd8] sm:$0xff]
    %v56 = vld [vmem:[#allocation2 + $0xe0] sm:$0xff]
    %v57 = vld [vmem:[#allocation2 + $0xe8] sm:$0xff]
    %v58 = vld [vmem:[#allocation2 + $0xf0] sm:$0xff]
    %v59 = vld [vmem:[#allocation2 + $0xf8] sm:$0xff]
    %v60 = vld [vmem:[%s1] sm:$0xff]
    %v61 = vld [vmem:[%s1 + $0x8] sm:$0xff]
    %v62 = vld [vmem:[%s1 + $0x10] sm:$0xff]
    %v63 = vld [vmem:[%s1 + $0x18] sm:$0xff]
    %v64 = vld [vmem:[%s1 + $0x20] sm:$0xff]
    %v65 = vld [vmem:[%s1 + $0x28] sm:$0xff]
    %v66 = vld [vmem:[%s1 + $0x30] sm:$0xff]
    %v67 = vld [vmem:[%s1 + $0x38] sm:$0xff]
    %v68 = vld [vmem:[%s1 + $0x40] sm:$0x1]
    %v69 = vadd.f32 %v28, %v29
    %70 = vadd.xlane.f32.xlu0 %v69
    %v71 = vpop.xlane.xlu0 %70
    %v72 = vadd.f32 %v30, %v31
    %73 = vadd.xlane.f32.xlu0 %v72
    %v74 = vpop.xlane.xlu0 %73
    %v75 = vadd.f32 %v32, %v33
    %76 = vadd.xlane.f32.xlu0 %v75
    %v77 = vpop.xlane.xlu0 %76
    %v78 = vadd.f32 %v34, %v35
    %79 = vadd.xlane.f32.xlu0 %v78
    %v80 = vpop.xlane.xlu0 %79
    %v81 = vadd.f32 %v36, %v37
    %82 = vadd.xlane.f32.xlu0 %v81
    %v83 = vpop.xlane.xlu0 %82
    %v84 = vadd.f32 %v38, %v39
    %85 = vadd.xlane.f32.xlu0 %v84
    %v86 = vpop.xlane.xlu0 %85
    %v87 = vadd.f32 %v40, %v41
    %88 = vadd.xlane.f32.xlu0 %v87
    %v89 = vpop.xlane.xlu0 %88
    %v90 = vadd.f32 %v42, %v43
    %91 = vadd.xlane.f32.xlu0 %v90
    %v92 = vpop.xlane.xlu0 %91
    %v93 = vadd.f32 %v44, %v45
    %94 = vadd.xlane.f32.xlu0 %v93
    %v95 = vpop.xlane.xlu0 %94
    %v96 = vadd.f32 %v46, %v47
    %97 = vadd.xlane.f32.xlu0 %v96
    %v98 = vpop.xlane.xlu0 %97
    %v99 = vadd.f32 %v48, %v49
    %100 = vadd.xlane.f32.xlu0 %v99
    %v101 = vpop.xlane.xlu0 %100
    %v102 = vadd.f32 %v50, %v51
    %103 = vadd.xlane.f32.xlu0 %v102
    %v104 = vpop.xlane.xlu0 %103
    %v105 = vadd.f32 %v52, %v53
    %106 = vadd.xlane.f32.xlu0 %v105
    %v107 = vpop.xlane.xlu0 %106
    %v108 = vadd.f32 %v54, %v55
    %109 = vadd.xlane.f32.xlu0 %v108
    %v110 = vpop.xlane.xlu0 %109
    %v111 = vadd.f32 %v56, %v57
    %112 = vadd.xlane.f32.xlu0 %v111
    %v113 = vpop.xlane.xlu0 %112
    %v114 = vadd.f32 %v58, %v59
    %115 = vadd.xlane.f32.xlu0 %v114
    %v116 = vpop.xlane.xlu0 %115
    %v117 = vmul.f32 %v71, 0.00390625
    %v118 = vmul.f32 %v74, 0.00390625
    %v119 = vmul.f32 %v77, 0.00390625
    %v120 = vmul.f32 %v80, 0.00390625
    %v121 = vmul.f32 %v83, 0.00390625
    %v122 = vmul.f32 %v86, 0.00390625
    %v123 = vmul.f32 %v89, 0.00390625
    %v124 = vmul.f32 %v92, 0.00390625
    %v125 = vmul.f32 %v95, 0.00390625
    %v126 = vmul.f32 %v98, 0.00390625
    %v127 = vmul.f32 %v101, 0.00390625
    %v128 = vmul.f32 %v104, 0.00390625
    %v129 = vmul.f32 %v107, 0.00390625
    %v130 = vmul.f32 %v110, 0.00390625
    %v131 = vmul.f32 %v113, 0.00390625
    %v132 = vmul.f32 %v116, 0.00390625
    %v133 = vmul.f32 %v60, %v117
    %v134 = vmul.f32 %v61, %v118
    %v135 = vmul.f32 %v62, %v119
    %v136 = vmul.f32 %v63, %v120
    %v137 = vmul.f32 %v64, %v121
    %v138 = vmul.f32 %v65, %v122
    %v139 = vmul.f32 %v66, %v123
    %v140 = vmul.f32 %v67, %v124
    %v141 = vmul.f32 %v60, %v125
    %v142 = vmul.f32 %v61, %v126
    %v143 = vmul.f32 %v62, %v127
    %v144 = vmul.f32 %v63, %v128
    %v145 = vmul.f32 %v64, %v129
    %v146 = vmul.f32 %v65, %v130
    %v147 = vmul.f32 %v66, %v131
    %v148 = vmul.f32 %v67, %v132
    %vm149 = vcmask 31744
    %v150 = vsel %vm149, %v133, 0.0
    %v151 = vsel %vm149, %v134, 0.0
    %v152 = vadd.f32 %v150, %v151
    %v153 = vsel %vm149, %v135, 0.0
    %v154 = vadd.f32 %v152, %v153
    %v155 = vsel %vm149, %v136, 0.0
    %v156 = vadd.f32 %v154, %v155
    %v157 = vsel %vm149, %v137, 0.0
    %v158 = vadd.f32 %v156, %v157
    %v159 = vsel %vm149, %v138, 0.0
    %v160 = vadd.f32 %v158, %v159
    %v161 = vsel %vm149, %v139, 0.0
    %v162 = vadd.f32 %v160, %v161
    %v163 = vsel %vm149, %v140, 0.0
    %v164 = vadd.f32 %v162, %v163
    %v165 = vrot.slane %v164, 4
    %v166 = vadd.f32 %v164, %v165
    %v167 = vrot.slane %v166, 2
    %v168 = vadd.f32 %v166, %v167
    %v169 = vrot.slane %v168, 1
    %v170 = vadd.f32 %v168, %v169
    %v171 = vsel %vm149, %v141, 0.0
    %v172 = vsel %vm149, %v142, 0.0
    %v173 = vadd.f32 %v171, %v172
    %v174 = vsel %vm149, %v143, 0.0
    %v175 = vadd.f32 %v173, %v174
    %v176 = vsel %vm149, %v144, 0.0
    %v177 = vadd.f32 %v175, %v176
    %v178 = vsel %vm149, %v145, 0.0
    %v179 = vadd.f32 %v177, %v178
    %v180 = vsel %vm149, %v146, 0.0
    %v181 = vadd.f32 %v179, %v180
    %v182 = vsel %vm149, %v147, 0.0
    %v183 = vadd.f32 %v181, %v182
    %v184 = vsel %vm149, %v148, 0.0
    %v185 = vadd.f32 %v183, %v184
    %v186 = vrot.slane %v185, 4
    %v187 = vadd.f32 %v185, %v186
    %v188 = vrot.slane %v187, 2
    %v189 = vadd.f32 %v187, %v188
    %v190 = vrot.slane %v189, 1
    %v191 = vadd.f32 %v189, %v190
    %v192 = vadd.f32 %v170, %v68
    %v193 = vadd.f32 %v191, %v68
    %v194 = vmax.f32 %v192, 0.0
    %v195 = vmax.f32 %v193, 0.0
    %v196 = vperm.slane %v194, 0
    %v197 = vperm.slane %v195, 0
    %200 = vrot.lane.b32.xlu0 %v196, 4
    %v201 = vpop.permute.xlu0 %200
    %202 = vrot.lane.b32.xlu0 %v197, 4
    %v203 = vpop.permute.xlu0 %202
    %v206 = vmul.f32 %v60, %v201
    %v207 = vmul.f32 %v61, %v201
    %v208 = vmul.f32 %v62, %v201
    %v209 = vmul.f32 %v63, %v201
    %v210 = vmul.f32 %v64, %v201
    %v211 = vmul.f32 %v65, %v201
    %v212 = vmul.f32 %v66, %v201
    %v213 = vmul.f32 %v67, %v201
    %v214 = vmul.f32 %v60, %v203
    %v215 = vmul.f32 %v61, %v203
    %v216 = vmul.f32 %v62, %v203
    %v217 = vmul.f32 %v63, %v203
    %v218 = vmul.f32 %v64, %v203
    %v219 = vmul.f32 %v65, %v203
    %v220 = vmul.f32 %v66, %v203
    %v221 = vmul.f32 %v67, %v203
    %238 = vrot.lane.b32.xlu0 %v206, 124
    %v239 = vpop.permute.xlu0 %238
    %240 = vrot.lane.b32.xlu0 %v207, 124
    %v241 = vpop.permute.xlu0 %240
    %242 = vrot.lane.b32.xlu0 %v208, 124
    %v243 = vpop.permute.xlu0 %242
    %244 = vrot.lane.b32.xlu0 %v209, 124
    %v245 = vpop.permute.xlu0 %244
    %246 = vrot.lane.b32.xlu0 %v210, 124
    %v247 = vpop.permute.xlu0 %246
    %248 = vrot.lane.b32.xlu0 %v211, 124
    %v249 = vpop.permute.xlu0 %248
    %250 = vrot.lane.b32.xlu0 %v212, 124
    %v251 = vpop.permute.xlu0 %250
    %252 = vrot.lane.b32.xlu0 %v213, 124
    %v253 = vpop.permute.xlu0 %252
    %254 = vrot.lane.b32.xlu0 %v214, 124
    %v255 = vpop.permute.xlu0 %254
    %256 = vrot.lane.b32.xlu0 %v215, 124
    %v257 = vpop.permute.xlu0 %256
    %258 = vrot.lane.b32.xlu0 %v216, 124
    %v259 = vpop.permute.xlu0 %258
    %260 = vrot.lane.b32.xlu0 %v217, 124
    %v261 = vpop.permute.xlu0 %260
    %262 = vrot.lane.b32.xlu0 %v218, 124
    %v263 = vpop.permute.xlu0 %262
    %264 = vrot.lane.b32.xlu0 %v219, 124
    %v265 = vpop.permute.xlu0 %264
    %266 = vrot.lane.b32.xlu0 %v220, 124
    %v267 = vpop.permute.xlu0 %266
    %268 = vrot.lane.b32.xlu0 %v221, 124
    %v269 = vpop.permute.xlu0 %268
    %v286 = vsel %vm149, %v239, 0.0
    %287 = vadd.xlane.f32.xlu0 %v286
    %v288 = vpop.xlane.xlu0 %287
    %v289 = vsel %vm149, %v241, 0.0
    %290 = vadd.xlane.f32.xlu0 %v289
    %v291 = vpop.xlane.xlu0 %290
    %v292 = vsel %vm149, %v243, 0.0
    %293 = vadd.xlane.f32.xlu0 %v292
    %v294 = vpop.xlane.xlu0 %293
    %v295 = vsel %vm149, %v245, 0.0
    %296 = vadd.xlane.f32.xlu0 %v295
    %v297 = vpop.xlane.xlu0 %296
    %v298 = vsel %vm149, %v247, 0.0
    %299 = vadd.xlane.f32.xlu0 %v298
    %v300 = vpop.xlane.xlu0 %299
    %v301 = vsel %vm149, %v249, 0.0
    %302 = vadd.xlane.f32.xlu0 %v301
    %v303 = vpop.xlane.xlu0 %302
    %v304 = vsel %vm149, %v251, 0.0
    %305 = vadd.xlane.f32.xlu0 %v304
    %v306 = vpop.xlane.xlu0 %305
    %v307 = vsel %vm149, %v253, 0.0
    %308 = vadd.xlane.f32.xlu0 %v307
    %v309 = vpop.xlane.xlu0 %308
    %v310 = vsel %vm149, %v255, 0.0
    %311 = vadd.xlane.f32.xlu0 %v310
    %v312 = vpop.xlane.xlu0 %311
    %v313 = vsel %vm149, %v257, 0.0
    %314 = vadd.xlane.f32.xlu0 %v313
    %v315 = vpop.xlane.xlu0 %314
    %v316 = vsel %vm149, %v259, 0.0
    %317 = vadd.xlane.f32.xlu0 %v316
    %v318 = vpop.xlane.xlu0 %317
    %v319 = vsel %vm149, %v261, 0.0
    %320 = vadd.xlane.f32.xlu0 %v319
    %v321 = vpop.xlane.xlu0 %320
    %v322 = vsel %vm149, %v263, 0.0
    %323 = vadd.xlane.f32.xlu0 %v322
    %v324 = vpop.xlane.xlu0 %323
    %v325 = vsel %vm149, %v265, 0.0
    %326 = vadd.xlane.f32.xlu0 %v325
    %v327 = vpop.xlane.xlu0 %326
    %v328 = vsel %vm149, %v267, 0.0
    %329 = vadd.xlane.f32.xlu0 %v328
    %v330 = vpop.xlane.xlu0 %329
    %v331 = vsel %vm149, %v269, 0.0
    %332 = vadd.xlane.f32.xlu0 %v331
    %v333 = vpop.xlane.xlu0 %332
    %v334 = vadd.f32 %v288, %v60
    %v335 = vadd.f32 %v291, %v61
    %v336 = vadd.f32 %v294, %v62
    %v337 = vadd.f32 %v297, %v63
    %v338 = vadd.f32 %v300, %v64
    %v339 = vadd.f32 %v303, %v65
    %v340 = vadd.f32 %v306, %v66
    %v341 = vadd.f32 %v309, %v67
    %v342 = vadd.f32 %v312, %v60
    %v343 = vadd.f32 %v315, %v61
    %v344 = vadd.f32 %v318, %v62
    %v345 = vadd.f32 %v321, %v63
    %v346 = vadd.f32 %v324, %v64
    %v347 = vadd.f32 %v327, %v65
    %v348 = vadd.f32 %v330, %v66
    %v349 = vadd.f32 %v333, %v67
    %v350 = vxor.u32 %v334, 2147483648
    %v351 = vxor.u32 %v335, 2147483648
    %v352 = vxor.u32 %v336, 2147483648
    %v353 = vxor.u32 %v337, 2147483648
    %v354 = vxor.u32 %v338, 2147483648
    %v355 = vxor.u32 %v339, 2147483648
    %v356 = vxor.u32 %v340, 2147483648
    %v357 = vxor.u32 %v341, 2147483648
    %v358 = vxor.u32 %v342, 2147483648
    %v359 = vxor.u32 %v343, 2147483648
    %v360 = vxor.u32 %v344, 2147483648
    %v361 = vxor.u32 %v345, 2147483648
    %v362 = vxor.u32 %v346, 2147483648
    %v363 = vxor.u32 %v347, 2147483648
    %v364 = vxor.u32 %v348, 2147483648
    %v365 = vxor.u32 %v349, 2147483648
    %v366 = vmul.f32 %v350, 1.442695
    %v367 = vpow.pop %v366
    %v368 = vmul.f32 %v351, 1.442695
    %v369 = vpow.pop %v368
    %v370 = vmul.f32 %v352, 1.442695
    %v371 = vpow.pop %v370
    %v372 = vmul.f32 %v353, 1.442695
    %v373 = vpow.pop %v372
    %v374 = vmul.f32 %v354, 1.442695
    %v375 = vpow.pop %v374
    %v376 = vmul.f32 %v355, 1.442695
    %v377 = vpow.pop %v376
    %v378 = vmul.f32 %v356, 1.442695
    %v379 = vpow.pop %v378
    %v380 = vmul.f32 %v357, 1.442695
    %v381 = vpow.pop %v380
    %v382 = vmul.f32 %v358, 1.442695
    %v383 = vpow.pop %v382
    %v384 = vmul.f32 %v359, 1.442695
    %v385 = vpow.pop %v384
    %v386 = vmul.f32 %v360, 1.442695
    %v387 = vpow.pop %v386
    %v388 = vmul.f32 %v361, 1.442695
    %v389 = vpow.pop %v388
    %v390 = vmul.f32 %v362, 1.442695
    %v391 = vpow.pop %v390
    %v392 = vmul.f32 %v363, 1.442695
    %v393 = vpow.pop %v392
    %v394 = vmul.f32 %v364, 1.442695
    %v395 = vpow.pop %v394
    %v396 = vmul.f32 %v365, 1.442695
    %v397 = vpow.pop %v396
    %v398 = vadd.f32 %v367, 1.0
    %v399 = vadd.f32 %v369, 1.0
    %v400 = vadd.f32 %v371, 1.0
    %v401 = vadd.f32 %v373, 1.0
    %v402 = vadd.f32 %v375, 1.0
    %v403 = vadd.f32 %v377, 1.0
    %v404 = vadd.f32 %v379, 1.0
    %v405 = vadd.f32 %v381, 1.0
    %v406 = vadd.f32 %v383, 1.0
    %v407 = vadd.f32 %v385, 1.0
    %v408 = vadd.f32 %v387, 1.0
    %v409 = vadd.f32 %v389, 1.0
    %v410 = vadd.f32 %v391, 1.0
    %v411 = vadd.f32 %v393, 1.0
    %v412 = vadd.f32 %v395, 1.0
    %v413 = vadd.f32 %v397, 1.0
    %v414 = vrcp.pop %v398
    %v415 = vmul.f32 %v398, %v414
    %v416 = vsub.f32 1.0, %v415
    %v417 = vmul.f32 %v414, %v416
    %v418 = vadd.f32 %v414, %v417
    %vm419 = vweird.f32 %v398
    %vm420 = vweird.f32 %v414
    %vm421 = vmor %vm419, %vm420
    %v422 = vsel %vm421, %v414, %v418
    %v423 = vand.u32 2147483647, %v398
    %vm424 = vcmp.eq.f32.partialorder %v423, 8.507059e+37
    %v425 = vand.u32 %v398, 2147483648
    %v426 = vor.u32 1.1754944e-38, %v425
    %v427 = vsel %vm424, %v426, %v422
    %v428 = vmul.f32 1.0, %v427
    %v429 = vrcp.pop %v399
    %v430 = vmul.f32 %v399, %v429
    %v431 = vsub.f32 1.0, %v430
    %v432 = vmul.f32 %v429, %v431
    %v433 = vadd.f32 %v429, %v432
    %vm434 = vweird.f32 %v399
    %vm435 = vweird.f32 %v429
    %vm436 = vmor %vm434, %vm435
    %v437 = vsel %vm436, %v429, %v433
    %v438 = vand.u32 2147483647, %v399
    %vm439 = vcmp.eq.f32.partialorder %v438, 8.507059e+37
    %v440 = vand.u32 %v399, 2147483648
    %v441 = vor.u32 1.1754944e-38, %v440
    %v442 = vsel %vm439, %v441, %v437
    %v443 = vmul.f32 1.0, %v442
    %v444 = vrcp.pop %v400
    %v445 = vmul.f32 %v400, %v444
    %v446 = vsub.f32 1.0, %v445
    %v447 = vmul.f32 %v444, %v446
    %v448 = vadd.f32 %v444, %v447
    %vm449 = vweird.f32 %v400
    %vm450 = vweird.f32 %v444
    %vm451 = vmor %vm449, %vm450
    %v452 = vsel %vm451, %v444, %v448
    %v453 = vand.u32 2147483647, %v400
    %vm454 = vcmp.eq.f32.partialorder %v453, 8.507059e+37
    %v455 = vand.u32 %v400, 2147483648
    %v456 = vor.u32 1.1754944e-38, %v455
    %v457 = vsel %vm454, %v456, %v452
    %v458 = vmul.f32 1.0, %v457
    %v459 = vrcp.pop %v401
    %v460 = vmul.f32 %v401, %v459
    %v461 = vsub.f32 1.0, %v460
    %v462 = vmul.f32 %v459, %v461
    %v463 = vadd.f32 %v459, %v462
    %vm464 = vweird.f32 %v401
    %vm465 = vweird.f32 %v459
    %vm466 = vmor %vm464, %vm465
    %v467 = vsel %vm466, %v459, %v463
    %v468 = vand.u32 2147483647, %v401
    %vm469 = vcmp.eq.f32.partialorder %v468, 8.507059e+37
    %v470 = vand.u32 %v401, 2147483648
    %v471 = vor.u32 1.1754944e-38, %v470
    %v472 = vsel %vm469, %v471, %v467
    %v473 = vmul.f32 1.0, %v472
    %v474 = vrcp.pop %v402
    %v475 = vmul.f32 %v402, %v474
    %v476 = vsub.f32 1.0, %v475
    %v477 = vmul.f32 %v474, %v476
    %v478 = vadd.f32 %v474, %v477
    %vm479 = vweird.f32 %v402
    %vm480 = vweird.f32 %v474
    %vm481 = vmor %vm479, %vm480
    %v482 = vsel %vm481, %v474, %v478
    %v483 = vand.u32 2147483647, %v402
    %vm484 = vcmp.eq.f32.partialorder %v483, 8.507059e+37
    %v485 = vand.u32 %v402, 2147483648
    %v486 = vor.u32 1.1754944e-38, %v485
    %v487 = vsel %vm484, %v486, %v482
    %v488 = vmul.f32 1.0, %v487
    %v489 = vrcp.pop %v403
    %v490 = vmul.f32 %v403, %v489
    %v491 = vsub.f32 1.0, %v490
    %v492 = vmul.f32 %v489, %v491
    %v493 = vadd.f32 %v489, %v492
    %vm494 = vweird.f32 %v403
    %vm495 = vweird.f32 %v489
    %vm496 = vmor %vm494, %vm495
    %v497 = vsel %vm496, %v489, %v493
    %v498 = vand.u32 2147483647, %v403
    %vm499 = vcmp.eq.f32.partialorder %v498, 8.507059e+37
    %v500 = vand.u32 %v403, 2147483648
    %v501 = vor.u32 1.1754944e-38, %v500
    %v502 = vsel %vm499, %v501, %v497
    %v503 = vmul.f32 1.0, %v502
    %v504 = vrcp.pop %v404
    %v505 = vmul.f32 %v404, %v504
    %v506 = vsub.f32 1.0, %v505
    %v507 = vmul.f32 %v504, %v506
    %v508 = vadd.f32 %v504, %v507
    %vm509 = vweird.f32 %v404
    %vm510 = vweird.f32 %v504
    %vm511 = vmor %vm509, %vm510
    %v512 = vsel %vm511, %v504, %v508
    %v513 = vand.u32 2147483647, %v404
    %vm514 = vcmp.eq.f32.partialorder %v513, 8.507059e+37
    %v515 = vand.u32 %v404, 2147483648
    %v516 = vor.u32 1.1754944e-38, %v515
    %v517 = vsel %vm514, %v516, %v512
    %v518 = vmul.f32 1.0, %v517
    %v519 = vrcp.pop %v405
    %v520 = vmul.f32 %v405, %v519
    %v521 = vsub.f32 1.0, %v520
    %v522 = vmul.f32 %v519, %v521
    %v523 = vadd.f32 %v519, %v522
    %vm524 = vweird.f32 %v405
    %vm525 = vweird.f32 %v519
    %vm526 = vmor %vm524, %vm525
    %v527 = vsel %vm526, %v519, %v523
    %v528 = vand.u32 2147483647, %v405
    %vm529 = vcmp.eq.f32.partialorder %v528, 8.507059e+37
    %v530 = vand.u32 %v405, 2147483648
    %v531 = vor.u32 1.1754944e-38, %v530
    %v532 = vsel %vm529, %v531, %v527
    %v533 = vmul.f32 1.0, %v532
    %v534 = vrcp.pop %v406
    %v535 = vmul.f32 %v406, %v534
    %v536 = vsub.f32 1.0, %v535
    %v537 = vmul.f32 %v534, %v536
    %v538 = vadd.f32 %v534, %v537
    %vm539 = vweird.f32 %v406
    %vm540 = vweird.f32 %v534
    %vm541 = vmor %vm539, %vm540
    %v542 = vsel %vm541, %v534, %v538
    %v543 = vand.u32 2147483647, %v406
    %vm544 = vcmp.eq.f32.partialorder %v543, 8.507059e+37
    %v545 = vand.u32 %v406, 2147483648
    %v546 = vor.u32 1.1754944e-38, %v545
    %v547 = vsel %vm544, %v546, %v542
    %v548 = vmul.f32 1.0, %v547
    %v549 = vrcp.pop %v407
    %v550 = vmul.f32 %v407, %v549
    %v551 = vsub.f32 1.0, %v550
    %v552 = vmul.f32 %v549, %v551
    %v553 = vadd.f32 %v549, %v552
    %vm554 = vweird.f32 %v407
    %vm555 = vweird.f32 %v549
    %vm556 = vmor %vm554, %vm555
    %v557 = vsel %vm556, %v549, %v553
    %v558 = vand.u32 2147483647, %v407
    %vm559 = vcmp.eq.f32.partialorder %v558, 8.507059e+37
    %v560 = vand.u32 %v407, 2147483648
    %v561 = vor.u32 1.1754944e-38, %v560
    %v562 = vsel %vm559, %v561, %v557
    %v563 = vmul.f32 1.0, %v562
    %v564 = vrcp.pop %v408
    %v565 = vmul.f32 %v408, %v564
    %v566 = vsub.f32 1.0, %v565
    %v567 = vmul.f32 %v564, %v566
    %v568 = vadd.f32 %v564, %v567
    %vm569 = vweird.f32 %v408
    %vm570 = vweird.f32 %v564
    %vm571 = vmor %vm569, %vm570
    %v572 = vsel %vm571, %v564, %v568
    %v573 = vand.u32 2147483647, %v408
    %vm574 = vcmp.eq.f32.partialorder %v573, 8.507059e+37
    %v575 = vand.u32 %v408, 2147483648
    %v576 = vor.u32 1.1754944e-38, %v575
    %v577 = vsel %vm574, %v576, %v572
    %v578 = vmul.f32 1.0, %v577
    %v579 = vrcp.pop %v409
    %v580 = vmul.f32 %v409, %v579
    %v581 = vsub.f32 1.0, %v580
    %v582 = vmul.f32 %v579, %v581
    %v583 = vadd.f32 %v579, %v582
    %vm584 = vweird.f32 %v409
    %vm585 = vweird.f32 %v579
    %vm586 = vmor %vm584, %vm585
    %v587 = vsel %vm586, %v579, %v583
    %v588 = vand.u32 2147483647, %v409
    %vm589 = vcmp.eq.f32.partialorder %v588, 8.507059e+37
    %v590 = vand.u32 %v409, 2147483648
    %v591 = vor.u32 1.1754944e-38, %v590
    %v592 = vsel %vm589, %v591, %v587
    %v593 = vmul.f32 1.0, %v592
    %v594 = vrcp.pop %v410
    %v595 = vmul.f32 %v410, %v594
    %v596 = vsub.f32 1.0, %v595
    %v597 = vmul.f32 %v594, %v596
    %v598 = vadd.f32 %v594, %v597
    %vm599 = vweird.f32 %v410
    %vm600 = vweird.f32 %v594
    %vm601 = vmor %vm599, %vm600
    %v602 = vsel %vm601, %v594, %v598
    %v603 = vand.u32 2147483647, %v410
    %vm604 = vcmp.eq.f32.partialorder %v603, 8.507059e+37
    %v605 = vand.u32 %v410, 2147483648
    %v606 = vor.u32 1.1754944e-38, %v605
    %v607 = vsel %vm604, %v606, %v602
    %v608 = vmul.f32 1.0, %v607
    %v609 = vrcp.pop %v411
    %v610 = vmul.f32 %v411, %v609
    %v611 = vsub.f32 1.0, %v610
    %v612 = vmul.f32 %v609, %v611
    %v613 = vadd.f32 %v609, %v612
    %vm614 = vweird.f32 %v411
    %vm615 = vweird.f32 %v609
    %vm616 = vmor %vm614, %vm615
    %v617 = vsel %vm616, %v609, %v613
    %v618 = vand.u32 2147483647, %v411
    %vm619 = vcmp.eq.f32.partialorder %v618, 8.507059e+37
    %v620 = vand.u32 %v411, 2147483648
    %v621 = vor.u32 1.1754944e-38, %v620
    %v622 = vsel %vm619, %v621, %v617
    %v623 = vmul.f32 1.0, %v622
    %v624 = vrcp.pop %v412
    %v625 = vmul.f32 %v412, %v624
    %v626 = vsub.f32 1.0, %v625
    %v627 = vmul.f32 %v624, %v626
    %v628 = vadd.f32 %v624, %v627
    %vm629 = vweird.f32 %v412
    %vm630 = vweird.f32 %v624
    %vm631 = vmor %vm629, %vm630
    %v632 = vsel %vm631, %v624, %v628
    %v633 = vand.u32 2147483647, %v412
    %vm634 = vcmp.eq.f32.partialorder %v633, 8.507059e+37
    %v635 = vand.u32 %v412, 2147483648
    %v636 = vor.u32 1.1754944e-38, %v635
    %v637 = vsel %vm634, %v636, %v632
    %v638 = vmul.f32 1.0, %v637
    %v639 = vrcp.pop %v413
    %v640 = vmul.f32 %v413, %v639
    %v641 = vsub.f32 1.0, %v640
    %v642 = vmul.f32 %v639, %v641
    %v643 = vadd.f32 %v639, %v642
    %vm644 = vweird.f32 %v413
    %vm645 = vweird.f32 %v639
    %vm646 = vmor %vm644, %vm645
    %v647 = vsel %vm646, %v639, %v643
    %v648 = vand.u32 2147483647, %v413
    %vm649 = vcmp.eq.f32.partialorder %v648, 8.507059e+37
    %v650 = vand.u32 %v413, 2147483648
    %v651 = vor.u32 1.1754944e-38, %v650
    %v652 = vsel %vm649, %v651, %v647
    %v653 = vmul.f32 1.0, %v652
    %655 = vset.pattern.permute.xlu0 9
    %656 = vperm.xlu0 %655, %v60
    %v657 = vpop.permute.xlu0 %656
    %660 = vset.pattern.permute.xlu0 9
    %661 = vperm.xlu0 %660, %v61
    %v662 = vpop.permute.xlu0 %661
    %665 = vset.pattern.permute.xlu0 9
    %666 = vperm.xlu0 %665, %v62
    %v667 = vpop.permute.xlu0 %666
    %670 = vset.pattern.permute.xlu0 9
    %671 = vperm.xlu0 %670, %v63
    %v672 = vpop.permute.xlu0 %671
    %675 = vset.pattern.permute.xlu0 9
    %676 = vperm.xlu0 %675, %v64
    %v677 = vpop.permute.xlu0 %676
    %680 = vset.pattern.permute.xlu0 9
    %681 = vperm.xlu0 %680, %v65
    %v682 = vpop.permute.xlu0 %681
    %685 = vset.pattern.permute.xlu0 9
    %686 = vperm.xlu0 %685, %v66
    %v687 = vpop.permute.xlu0 %686
    %690 = vset.pattern.permute.xlu0 9
    %691 = vperm.xlu0 %690, %v67
    %v692 = vpop.permute.xlu0 %691
    %v694 = vmul.f32 %v28, %v657
    %v695 = vmul.f32 %v29, %v657
    %v696 = vmul.f32 %v30, %v662
    %v697 = vmul.f32 %v31, %v662
    %v698 = vmul.f32 %v32, %v667
    %v699 = vmul.f32 %v33, %v667
    %v700 = vmul.f32 %v34, %v672
    %v701 = vmul.f32 %v35, %v672
    %v702 = vmul.f32 %v36, %v677
    %v703 = vmul.f32 %v37, %v677
    %v704 = vmul.f32 %v38, %v682
    %v705 = vmul.f32 %v39, %v682
    %v706 = vmul.f32 %v40, %v687
    %v707 = vmul.f32 %v41, %v687
    %v708 = vmul.f32 %v42, %v692
    %v709 = vmul.f32 %v43, %v692
    %v710 = vmul.f32 %v44, %v657
    %v711 = vmul.f32 %v45, %v657
    %v712 = vmul.f32 %v46, %v662
    %v713 = vmul.f32 %v47, %v662
    %v714 = vmul.f32 %v48, %v667
    %v715 = vmul.f32 %v49, %v667
    %v716 = vmul.f32 %v50, %v672
    %v717 = vmul.f32 %v51, %v672
    %v718 = vmul.f32 %v52, %v677
    %v719 = vmul.f32 %v53, %v677
    %v720 = vmul.f32 %v54, %v682
    %v721 = vmul.f32 %v55, %v682
    %v722 = vmul.f32 %v56, %v687
    %v723 = vmul.f32 %v57, %v687
    %v724 = vmul.f32 %v58, %v692
    %v725 = vmul.f32 %v59, %v692
    %v726 = vadd.f32 %v694, %v696
    %v727 = vadd.f32 %v726, %v698
    %v728 = vadd.f32 %v727, %v700
    %v729 = vadd.f32 %v728, %v702
    %v730 = vadd.f32 %v729, %v704
    %v731 = vadd.f32 %v730, %v706
    %v732 = vadd.f32 %v731, %v708
    %v733 = vrot.slane %v732, 4
    %v734 = vadd.f32 %v732, %v733
    %v735 = vrot.slane %v734, 2
    %v736 = vadd.f32 %v734, %v735
    %v737 = vrot.slane %v736, 1
    %v738 = vadd.f32 %v736, %v737
    %v739 = vadd.f32 %v695, %v697
    %v740 = vadd.f32 %v739, %v699
    %v741 = vadd.f32 %v740, %v701
    %v742 = vadd.f32 %v741, %v703
    %v743 = vadd.f32 %v742, %v705
    %v744 = vadd.f32 %v743, %v707
    %v745 = vadd.f32 %v744, %v709
    %v746 = vrot.slane %v745, 4
    %v747 = vadd.f32 %v745, %v746
    %v748 = vrot.slane %v747, 2
    %v749 = vadd.f32 %v747, %v748
    %v750 = vrot.slane %v749, 1
    %v751 = vadd.f32 %v749, %v750
    %v752 = vadd.f32 %v710, %v712
    %v753 = vadd.f32 %v752, %v714
    %v754 = vadd.f32 %v753, %v716
    %v755 = vadd.f32 %v754, %v718
    %v756 = vadd.f32 %v755, %v720
    %v757 = vadd.f32 %v756, %v722
    %v758 = vadd.f32 %v757, %v724
    %v759 = vrot.slane %v758, 4
    %v760 = vadd.f32 %v758, %v759
    %v761 = vrot.slane %v760, 2
    %v762 = vadd.f32 %v760, %v761
    %v763 = vrot.slane %v762, 1
    %v764 = vadd.f32 %v762, %v763
    %v765 = vadd.f32 %v711, %v713
    %v766 = vadd.f32 %v765, %v715
    %v767 = vadd.f32 %v766, %v717
    %v768 = vadd.f32 %v767, %v719
    %v769 = vadd.f32 %v768, %v721
    %v770 = vadd.f32 %v769, %v723
    %v771 = vadd.f32 %v770, %v725
    %v772 = vrot.slane %v771, 4
    %v773 = vadd.f32 %v771, %v772
    %v774 = vrot.slane %v773, 2
    %v775 = vadd.f32 %v773, %v774
    %v776 = vrot.slane %v775, 1
    %v777 = vadd.f32 %v775, %v776
    %779 = vset.pattern.permute.xlu0 4
    %780 = vperm.xlu0 %779, %v68
    %v781 = vpop.permute.xlu0 %780
    %v783 = vadd.f32 %v738, %v781
    %v784 = vadd.f32 %v751, %v781
    %v785 = vadd.f32 %v764, %v781
    %v786 = vadd.f32 %v777, %v781
    %v787 = vxor.u32 %v783, 2147483648
    %v788 = vxor.u32 %v784, 2147483648
    %v789 = vxor.u32 %v785, 2147483648
    %v790 = vxor.u32 %v786, 2147483648
    %v791 = vmul.f32 %v787, 1.442695
    %v792 = vpow.pop %v791
    %v793 = vmul.f32 %v788, 1.442695
    %v794 = vpow.pop %v793
    %v795 = vmul.f32 %v789, 1.442695
    %v796 = vpow.pop %v795
    %v797 = vmul.f32 %v790, 1.442695
    %v798 = vpow.pop %v797
    %v799 = vadd.f32 %v792, 1.0
    %v800 = vadd.f32 %v794, 1.0
    %v801 = vadd.f32 %v796, 1.0
    %v802 = vadd.f32 %v798, 1.0
    %v803 = vrcp.pop %v799
    %v804 = vmul.f32 %v799, %v803
    %v805 = vsub.f32 1.0, %v804
    %v806 = vmul.f32 %v803, %v805
    %v807 = vadd.f32 %v803, %v806
    %vm808 = vweird.f32 %v799
    %vm809 = vweird.f32 %v803
    %vm810 = vmor %vm808, %vm809
    %v811 = vsel %vm810, %v803, %v807
    %v812 = vand.u32 2147483647, %v799
    %vm813 = vcmp.eq.f32.partialorder %v812, 8.507059e+37
    %v814 = vand.u32 %v799, 2147483648
    %v815 = vor.u32 1.1754944e-38, %v814
    %v816 = vsel %vm813, %v815, %v811
    %v817 = vmul.f32 1.0, %v816
    %v818 = vrcp.pop %v800
    %v819 = vmul.f32 %v800, %v818
    %v820 = vsub.f32 1.0, %v819
    %v821 = vmul.f32 %v818, %v820
    %v822 = vadd.f32 %v818, %v821
    %vm823 = vweird.f32 %v800
    %vm824 = vweird.f32 %v818
    %vm825 = vmor %vm823, %vm824
    %v826 = vsel %vm825, %v818, %v822
    %v827 = vand.u32 2147483647, %v800
    %vm828 = vcmp.eq.f32.partialorder %v827, 8.507059e+37
    %v829 = vand.u32 %v800, 2147483648
    %v830 = vor.u32 1.1754944e-38, %v829
    %v831 = vsel %vm828, %v830, %v826
    %v832 = vmul.f32 1.0, %v831
    %v833 = vrcp.pop %v801
    %v834 = vmul.f32 %v801, %v833
    %v835 = vsub.f32 1.0, %v834
    %v836 = vmul.f32 %v833, %v835
    %v837 = vadd.f32 %v833, %v836
    %vm838 = vweird.f32 %v801
    %vm839 = vweird.f32 %v833
    %vm840 = vmor %vm838, %vm839
    %v841 = vsel %vm840, %v833, %v837
    %v842 = vand.u32 2147483647, %v801
    %vm843 = vcmp.eq.f32.partialorder %v842, 8.507059e+37
    %v844 = vand.u32 %v801, 2147483648
    %v845 = vor.u32 1.1754944e-38, %v844
    %v846 = vsel %vm843, %v845, %v841
    %v847 = vmul.f32 1.0, %v846
    %v848 = vrcp.pop %v802
    %v849 = vmul.f32 %v802, %v848
    %v850 = vsub.f32 1.0, %v849
    %v851 = vmul.f32 %v848, %v850
    %v852 = vadd.f32 %v848, %v851
    %vm853 = vweird.f32 %v802
    %vm854 = vweird.f32 %v848
    %vm855 = vmor %vm853, %vm854
    %v856 = vsel %vm855, %v848, %v852
    %v857 = vand.u32 2147483647, %v802
    %vm858 = vcmp.eq.f32.partialorder %v857, 8.507059e+37
    %v859 = vand.u32 %v802, 2147483648
    %v860 = vor.u32 1.1754944e-38, %v859
    %v861 = vsel %vm858, %v860, %v856
    %v862 = vmul.f32 1.0, %v861
    %864 = vset.pattern.permute.xlu0 8
    %865 = vperm.xlu0 %864, %v428
    %v866 = vpop.permute.xlu0 %865
    %869 = vset.pattern.permute.xlu0 8
    %870 = vperm.xlu0 %869, %v443
    %v871 = vpop.permute.xlu0 %870
    %874 = vset.pattern.permute.xlu0 8
    %875 = vperm.xlu0 %874, %v458
    %v876 = vpop.permute.xlu0 %875
    %879 = vset.pattern.permute.xlu0 8
    %880 = vperm.xlu0 %879, %v473
    %v881 = vpop.permute.xlu0 %880
    %884 = vset.pattern.permute.xlu0 8
    %885 = vperm.xlu0 %884, %v488
    %v886 = vpop.permute.xlu0 %885
    %889 = vset.pattern.permute.xlu0 8
    %890 = vperm.xlu0 %889, %v503
    %v891 = vpop.permute.xlu0 %890
    %894 = vset.pattern.permute.xlu0 8
    %895 = vperm.xlu0 %894, %v518
    %v896 = vpop.permute.xlu0 %895
    %899 = vset.pattern.permute.xlu0 8
    %900 = vperm.xlu0 %899, %v533
    %v901 = vpop.permute.xlu0 %900
    %904 = vset.pattern.permute.xlu0 8
    %905 = vperm.xlu0 %904, %v548
    %v906 = vpop.permute.xlu0 %905
    %909 = vset.pattern.permute.xlu0 8
    %910 = vperm.xlu0 %909, %v563
    %v911 = vpop.permute.xlu0 %910
    %914 = vset.pattern.permute.xlu0 8
    %915 = vperm.xlu0 %914, %v578
    %v916 = vpop.permute.xlu0 %915
    %919 = vset.pattern.permute.xlu0 8
    %920 = vperm.xlu0 %919, %v593
    %v921 = vpop.permute.xlu0 %920
    %924 = vset.pattern.permute.xlu0 8
    %925 = vperm.xlu0 %924, %v608
    %v926 = vpop.permute.xlu0 %925
    %929 = vset.pattern.permute.xlu0 8
    %930 = vperm.xlu0 %929, %v623
    %v931 = vpop.permute.xlu0 %930
    %934 = vset.pattern.permute.xlu0 8
    %935 = vperm.xlu0 %934, %v638
    %v936 = vpop.permute.xlu0 %935
    %939 = vset.pattern.permute.xlu0 8
    %940 = vperm.xlu0 %939, %v653
    %v941 = vpop.permute.xlu0 %940
    %v943 = vmul.f32 %v28, %v866
    %v944 = vmul.f32 %v29, %v866
    %v945 = vmul.f32 %v30, %v871
    %v946 = vmul.f32 %v31, %v871
    %v947 = vmul.f32 %v32, %v876
    %v948 = vmul.f32 %v33, %v876
    %v949 = vmul.f32 %v34, %v881
    %v950 = vmul.f32 %v35, %v881
    %v951 = vmul.f32 %v36, %v886
    %v952 = vmul.f32 %v37, %v886
    %v953 = vmul.f32 %v38, %v891
    %v954 = vmul.f32 %v39, %v891
    %v955 = vmul.f32 %v40, %v896
    %v956 = vmul.f32 %v41, %v896
    %v957 = vmul.f32 %v42, %v901
    %v958 = vmul.f32 %v43, %v901
    %v959 = vmul.f32 %v44, %v906
    %v960 = vmul.f32 %v45, %v906
    %v961 = vmul.f32 %v46, %v911
    %v962 = vmul.f32 %v47, %v911
    %v963 = vmul.f32 %v48, %v916
    %v964 = vmul.f32 %v49, %v916
    %v965 = vmul.f32 %v50, %v921
    %v966 = vmul.f32 %v51, %v921
    %v967 = vmul.f32 %v52, %v926
    %v968 = vmul.f32 %v53, %v926
    %v969 = vmul.f32 %v54, %v931
    %v970 = vmul.f32 %v55, %v931
    %v971 = vmul.f32 %v56, %v936
    %v972 = vmul.f32 %v57, %v936
    %v973 = vmul.f32 %v58, %v941
    %v974 = vmul.f32 %v59, %v941
    %v975 = vperm.slane %v817, 0
    %v976 = vperm.slane %v832, 0
    %v977 = vperm.slane %v847, 0
    %v978 = vperm.slane %v862, 0
    %v979 = vmul.f32 %v28, %v975
    %v980 = vmul.f32 %v29, %v976
    %v981 = vmul.f32 %v30, %v975
    %v982 = vmul.f32 %v31, %v976
    %v983 = vmul.f32 %v32, %v975
    %v984 = vmul.f32 %v33, %v976
    %v985 = vmul.f32 %v34, %v975
    %v986 = vmul.f32 %v35, %v976
    %v987 = vmul.f32 %v36, %v975
    %v988 = vmul.f32 %v37, %v976
    %v989 = vmul.f32 %v38, %v975
    %v990 = vmul.f32 %v39, %v976
    %v991 = vmul.f32 %v40, %v975
    %v992 = vmul.f32 %v41, %v976
    %v993 = vmul.f32 %v42, %v975
    %v994 = vmul.f32 %v43, %v976
    %v995 = vmul.f32 %v44, %v977
    %v996 = vmul.f32 %v45, %v978
    %v997 = vmul.f32 %v46, %v977
    %v998 = vmul.f32 %v47, %v978
    %v999 = vmul.f32 %v48, %v977
    %v1000 = vmul.f32 %v49, %v978
    %v1001 = vmul.f32 %v50, %v977
    %v1002 = vmul.f32 %v51, %v978
    %v1003 = vmul.f32 %v52, %v977
    %v1004 = vmul.f32 %v53, %v978
    %v1005 = vmul.f32 %v54, %v977
    %v1006 = vmul.f32 %v55, %v978
    %v1007 = vmul.f32 %v56, %v977
    %v1008 = vmul.f32 %v57, %v978
    %v1009 = vmul.f32 %v58, %v977
    %v1010 = vmul.f32 %v59, %v978
    %v1011 = vadd.f32 %v943, %v979
    %v1012 = vadd.f32 %v944, %v980
    %v1013 = vadd.f32 %v945, %v981
    %v1014 = vadd.f32 %v946, %v982
    %v1015 = vadd.f32 %v947, %v983
    %v1016 = vadd.f32 %v948, %v984
    %v1017 = vadd.f32 %v949, %v985
    %v1018 = vadd.f32 %v950, %v986
    %v1019 = vadd.f32 %v951, %v987
    %v1020 = vadd.f32 %v952, %v988
    %v1021 = vadd.f32 %v953, %v989
    %v1022 = vadd.f32 %v954, %v990
    %v1023 = vadd.f32 %v955, %v991
    %v1024 = vadd.f32 %v956, %v992
    %v1025 = vadd.f32 %v957, %v993
    %v1026 = vadd.f32 %v958, %v994
    %v1027 = vadd.f32 %v959, %v995
    %v1028 = vadd.f32 %v960, %v996
    %v1029 = vadd.f32 %v961, %v997
    %v1030 = vadd.f32 %v962, %v998
    %v1031 = vadd.f32 %v963, %v999
    %v1032 = vadd.f32 %v964, %v1000
    %v1033 = vadd.f32 %v965, %v1001
    %v1034 = vadd.f32 %v966, %v1002
    %v1035 = vadd.f32 %v967, %v1003
    %v1036 = vadd.f32 %v968, %v1004
    %v1037 = vadd.f32 %v969, %v1005
    %v1038 = vadd.f32 %v970, %v1006
    %v1039 = vadd.f32 %v971, %v1007
    %v1040 = vadd.f32 %v972, %v1008
    %v1041 = vadd.f32 %v973, %v1009
    %v1042 = vadd.f32 %v974, %v1010
    %1043 = vst [vmem:[#allocation5] sm:$0xff] %v1011
    %1044 = vst [vmem:[#allocation5 + $0x8] sm:$0xff] %v1012
    %1045 = vst [vmem:[#allocation5 + $0x10] sm:$0xff] %v1013
    %1046 = vst [vmem:[#allocation5 + $0x18] sm:$0xff] %v1014
    %1047 = vst [vmem:[#allocation5 + $0x20] sm:$0xff] %v1015
    %1048 = vst [vmem:[#allocation5 + $0x28] sm:$0xff] %v1016
    %1049 = vst [vmem:[#allocation5 + $0x30] sm:$0xff] %v1017
    %1050 = vst [vmem:[#allocation5 + $0x38] sm:$0xff] %v1018
    %1051 = vst [vmem:[#allocation5 + $0x40] sm:$0xff] %v1019
    %1052 = vst [vmem:[#allocation5 + $0x48] sm:$0xff] %v1020
    %1053 = vst [vmem:[#allocation5 + $0x50] sm:$0xff] %v1021
    %1054 = vst [vmem:[#allocation5 + $0x58] sm:$0xff] %v1022
    %1055 = vst [vmem:[#allocation5 + $0x60] sm:$0xff] %v1023
    %1056 = vst [vmem:[#allocation5 + $0x68] sm:$0xff] %v1024
    %1057 = vst [vmem:[#allocation5 + $0x70] sm:$0xff] %v1025
    %1058 = vst [vmem:[#allocation5 + $0x78] sm:$0xff] %v1026
    %1059 = vst [vmem:[#allocation5 + $0x80] sm:$0xff] %v1027
    %1060 = vst [vmem:[#allocation5 + $0x88] sm:$0xff] %v1028
    %1061 = vst [vmem:[#allocation5 + $0x90] sm:$0xff] %v1029
    %1062 = vst [vmem:[#allocation5 + $0x98] sm:$0xff] %v1030
    %1063 = vst [vmem:[#allocation5 + $0xa0] sm:$0xff] %v1031
    %1064 = vst [vmem:[#allocation5 + $0xa8] sm:$0xff] %v1032
    %1065 = vst [vmem:[#allocation5 + $0xb0] sm:$0xff] %v1033
    %1066 = vst [vmem:[#allocation5 + $0xb8] sm:$0xff] %v1034
    %1067 = vst [vmem:[#allocation5 + $0xc0] sm:$0xff] %v1035
    %1068 = vst [vmem:[#allocation5 + $0xc8] sm:$0xff] %v1036
    %1069 = vst [vmem:[#allocation5 + $0xd0] sm:$0xff] %v1037
    %1070 = vst [vmem:[#allocation5 + $0xd8] sm:$0xff] %v1038
    %1071 = vst [vmem:[#allocation5 + $0xe0] sm:$0xff] %v1039
    %1072 = vst [vmem:[#allocation5 + $0xe8] sm:$0xff] %v1040
    %1073 = vst [vmem:[#allocation5 + $0xf0] sm:$0xff] %v1041
    %1074 = vst [vmem:[#allocation5 + $0xf8] sm:$0xff] %v1042
    // Predicated region
    $region14: #{tpu_custom_call.1} parent=1 // pred_check
      _
    $region15: #{tpu_custom_call.1} parent=1 // pred_check_branch
      %1076 = sbr.rel (0) target = $region17
    $region16: #{tpu_custom_call.1} parent=1 // pred_region
      %1078 = vsyncadd [#allocation4], 0
      %s1079 = sshll.u32 [#allocation5], 4
      %s1080 = int_to_ptr.vmem [resolvable:$true] %s1079
      %s1081 = sshll.u32 %s2, 4
      %s1082 = int_to_ptr.hbm [resolvable:$true] %s1081
      %1087 = dma.vmem_to_hbm [thread:$0]  %s1080, 4096, %s1082, [#allocation4], 256, 256, 16
    $region17: #{tpu_custom_call.1} parent=1 // pred_fallthru
      _
    // Predicated region
    $region18: #{tpu_custom_call.1} parent=1 // pred_check
      _
    $region19: #{tpu_custom_call.1} parent=1 // pred_check_branch
      %1089 = sbr.rel (0) target = $region21
    $region20: #{tpu_custom_call.1} parent=1 // pred_region
      %1091 = dma.done [#allocation4], 4096
    $region21: #{tpu_custom_call.1} parent=1 // pred_fallthru
      _
    %1092 = vsyncpa [#allocation3], 1
    %1093 = vsyncpa [#allocation4], 1

</llo_original>
